<compile_context>
chip_gen: v7x
topology: tpu7x:2x2x1
jax: 0.10.0
libtpu: 0.0.40
codegen_flags: <defaults>
</compile_context>

<pallas_src>
import jax
import jax.numpy as jnp
from jax import lax
from jax.experimental import pallas as pl
from jax.experimental.pallas import tpu as pltpu


# --------------------------------------------------------------------------- #
# Kernel
# --------------------------------------------------------------------------- #
def _rnn_seq_kernel(x_ref, wih_ref, whh_ref, b_ref, out_ref, p_ref, h_ref):
    """One (batch-tile, time-chunk) grid step of the unrolled tanh RNN.

    x_ref  : (t_chunk, b_tile, D)   time-major input slab (compute dtype)
    wih_ref: (D, H)                 resident input->hidden weights
    whh_ref: (H, H)                 resident hidden->hidden weights
    b_ref  : (1, H) f32             bias (b_ih + b_hh)
    out_ref: (t_chunk, b_tile, H)   time-major output slab
    p_ref  : (t_chunk, b_tile, H)   f32 scratch: chunk input projection
    h_ref  : (b_tile, H) f32        hidden state, carried across time chunks
    """
    ic = pl.program_id(1)                     # time-chunk index (sequential)

    @pl.when(ic == 0)
    def _():
        # New batch tile: zero hidden state (matches torch.zeros init).
        h_ref[...] = jnp.zeros_like(h_ref)

    t_chunk, b_tile, d = x_ref.shape
    h_dim = out_ref.shape[-1]

    # ---- Chunk input projection: one large MXU matmul, off the serial chain.
    # (t_chunk*b_tile, D) @ (D, H) with f32 accumulation; bias added in f32.
    x_flat = x_ref[...].reshape(t_chunk * b_tile, d)
    p = jnp.dot(x_flat, wih_ref[...], preferred_element_type=jnp.float32)
    p_ref[...] = (p + b_ref[...]).reshape(t_chunk, b_tile, h_dim)

    w_hh = whh_ref[...]                       # load once, reuse every step

    # ---- Serial recurrence.  Leading-axis indexing of p_ref / out_ref gives
    # dense (unmasked) vld / vst; bounded unroll keeps vreg live ranges small
    # while still giving the scheduler straight-line code.
    def step(i, h):
        pre = jnp.dot(h.astype(w_hh.dtype), w_hh,
                      preferred_element_type=jnp.float32) + p_ref[i]
        h_new = jnp.tanh(pre)                 # hidden state / tanh stay f32
        out_ref[i] = h_new.astype(out_ref.dtype)
        return h_new

    h_ref[...] = lax.fori_loop(0, t_chunk, step, h_ref[...],
                               unroll=min(t_chunk, 8))


# --------------------------------------------------------------------------- #
# Sizing helpers
# --------------------------------------------------------------------------- #
def _round_up(x, m):
    return ((x + m - 1) // m) * m


def _shrink(v, floor=8):
    """Roughly halve v, keeping it a positive multiple of 8 (>= floor)."""
    if v <= floor:
        return floor
    return max(floor, 8 * ((v // 2) // 8))


def _default_compute_dtype():
    # bf16 operands are MXU-native on v5e/v6e/v7x (f32 accumulation is kept via
    # preferred_element_type).  Off-TPU (e.g. CPU interpreter) there is no
    # bf16 x bf16 -> f32 dot, so fall back to f32.
    try:
        if jax.devices()[0].platform == "tpu":
            return jnp.bfloat16
    except Exception:
        pass
    return jnp.float32


def _vmem_capacity_bytes():
    try:
        return int(pltpu.get_tpu_info().vmem_capacity_bytes)
    except Exception:
        return 64 * 1024 * 1024               # v7x-safe fallback


def _working_set_bytes(t_chunk, b_tile, d, h_pad, c_size, o_size):
    # TODO(synk): single-buffer the resident weights (pipeline_mode=
    # pl.Buffered(1)) to halve their footprint for very large H on v7x.
    weights = 2 * (d * h_pad + h_pad * h_pad) * c_size   # default 2 buffers
    bias = 2 * h_pad * 4
    x_blk = 2 * t_chunk * b_tile * d * c_size            # double-buffered
    o_blk = 2 * t_chunk * b_tile * h_pad * o_size        # double-buffered
    p_scr = t_chunk * b_tile * h_pad * 4
    h_scr = b_tile * h_pad * 4
    return weights + bias + x_blk + o_blk + p_scr + h_scr


# --------------------------------------------------------------------------- #
# Wrapper
# --------------------------------------------------------------------------- #
def rnn_sequence(x, w_ih, w_hh, b, *, t_chunk=None, b_tile=None,
                 compute_dtype=None, out_dtype=None):
    """Unrolled tanh-RNN over time (RNNSequence with an Elman rnn_cell).

    x    : (B, T, D) batch-first input (as in the PyTorch module)
    w_ih : (D, H)  input->hidden weights (pre-transposed vs torch's (H, D))
    w_hh : (H, H)  hidden->hidden weights (pre-transposed)
    b    : (H,)    combined bias (b_ih + b_hh)
    Returns (B, T, H) with outputs[:, t] = h_t.
    """
    B, T, D = x.shape
    H = w_hh.shape[0]
    assert w_ih.shape == (D, H) and w_hh.shape == (H, H) and b.shape == (H,)

    if compute_dtype is None:
        compute_dtype = _default_compute_dtype()
    if out_dtype is None:
        # bf16 here would halve the output HBM stream on v5e/v6e; keep the
        # module's dtype by default for exact forward semantics.
        out_dtype = x.dtype

    c_size = jnp.dtype(compute_dtype).itemsize
    o_size = jnp.dtype(out_dtype).itemsize

    # ---- Padded problem sizes: lane-dense H, sublane-aligned batch ---------
    h_pad = _round_up(H, 128)
    b_pad8 = _round_up(B, 8)

    # ---- Tile selection from a per-generation VMEM budget ------------------
    cap = _vmem_capacity_bytes()
    budget = int(0.85 * cap)
    if t_chunk is None:
        t_chunk = min(_round_up(T, 8), 32)
    if b_tile is None:
        # Whole batch per tile unless VMEM forces a split (extra batch grid
        # steps are pure serial overhead on single-TensorCore parts); keep at
        # least 128 rows when the batch allows it (MXU fill).
        b_tile = min(b_pad8, 512)
    b_floor = min(128, b_pad8)
    while (_working_set_bytes(t_chunk, b_tile, D, h_pad, c_size, o_size)
           > budget and t_chunk > 8):
        t_chunk = _shrink(t_chunk)
    while (_working_set_bytes(t_chunk, b_tile, D, h_pad, c_size, o_size)
           > budget and b_tile > b_floor):
        b_tile = _shrink(b_tile, b_floor)
    assert t_chunk % 8 == 0 and b_tile % 8 == 0

    B_pad = _round_up(b_pad8, b_tile)
    T_pad = _round_up(T, t_chunk)
    n_b = B_pad // b_tile
    n_c = T_pad // t_chunk

    need = _working_set_bytes(t_chunk, b_tile, D, h_pad, c_size, o_size)
    vmem_limit = int(min(cap, max(32 * 1024 * 1024, int(1.2 * need))))

    # ---- Wrapper-side layout prep (off the serial critical path) -----------
    # Zero-padding is exact for this recurrence: padded H columns stay 0
    # (tanh(0) = 0, zero rows/cols of W_hh), padded batch rows / trailing time
    # steps are sliced off below and never feed back into real rows.
    xc = x.astype(compute_dtype)
    xc = jnp.pad(xc, ((0, B_pad - B), (0, T_pad - T), (0, 0)))
    x_t = jnp.transpose(xc, (1, 0, 2))        # (T_pad, B_pad, D) time-major
    # TODO(synk): fold this x transpose and the output transpose below into
    # the kernel (in-VMEM sublane transpose) to drop the two extra HBM passes.

    w_ih_p = jnp.zeros((D, h_pad), compute_dtype).at[:, :H].set(
        w_ih.astype(compute_dtype))
    w_hh_p = jnp.zeros((h_pad, h_pad), compute_dtype).at[:H, :H].set(
        w_hh.astype(compute_dtype))
    b_p = jnp.zeros((1, h_pad), jnp.float32).at[0, :H].set(
        b.astype(jnp.float32))

    out_t = pl.pallas_call(
        _rnn_seq_kernel,
        out_shape=jax.ShapeDtypeStruct((T_pad, B_pad, h_pad), out_dtype),
        grid_spec=pltpu.PrefetchScalarGridSpec(
            num_scalar_prefetch=0,
            grid=(n_b, n_c),
            in_specs=[
                # Time-major x slab for this (batch tile, time chunk).
                pl.BlockSpec((t_chunk, b_tile, D), lambda ib, ic: (ic, ib, 0)),
                # Resident weights / bias (constant index map -> fetched once).
                pl.BlockSpec((D, h_pad), lambda ib, ic: (0, 0)),
                pl.BlockSpec((h_pad, h_pad), lambda ib, ic: (0, 0)),
                pl.BlockSpec((1, h_pad), lambda ib, ic: (0, 0)),
            ],
            # Time-major output slab: per-step `out_ref[i] = h` stores are
            # dense (leading-axis index, lane-dense padded H).
            out_specs=pl.BlockSpec((t_chunk, b_tile, h_pad),
                                   lambda ib, ic: (ic, ib, 0)),
            scratch_shapes=[
                pltpu.VMEM((t_chunk, b_tile, h_pad), jnp.float32),  # P chunk
                pltpu.VMEM((b_tile, h_pad), jnp.float32),           # hidden h
            ],
        ),
        compiler_params=pltpu.CompilerParams(
            # Batch tiles are independent -> "parallel" (megacore split); the
            # time-chunk axis carries the recurrence through VMEM scratch and
            # MUST stay "arbitrary".
            dimension_semantics=("parallel", "arbitrary"),
            vmem_limit_bytes=vmem_limit,
        ),
    )(x_t, w_ih_p, w_hh_p, b_p)

    # (T_pad, B_pad, h_pad) -> (B, T, H): one XLA transpose off the serial path.
    out = jnp.transpose(out_t, (1, 0, 2))[:B, :T, :H]
    return out.astype(x.dtype)


# --------------------------------------------------------------------------- #
# Pure-JAX reference (mirrors the PyTorch unrolled loop)
# --------------------------------------------------------------------------- #
def rnn_sequence_ref(x, w_ih, w_hh, b):
    B, T, D = x.shape
    H = w_hh.shape[0]
    h = jnp.zeros((B, H), jnp.float32)
    outs = []
    for t in range(T):
        h = jnp.tanh(x[:, t] @ w_ih + h @ w_hh + b)
        outs.append(h)
    return jnp.stack(outs, axis=1)


if __name__ == "__main__":
    key = jax.random.PRNGKey(0)
    k_x, k_ih, k_hh, k_b = jax.random.split(key, 4)

    B, T, D, H = 8, 8, 32, 32   # batch, seq, input_size, hidden (state_size)

    x = jax.random.normal(k_x, (B, T, D), dtype=jnp.float32)
    w_ih = jax.random.normal(k_ih, (D, H), dtype=jnp.float32) * 0.1
    w_hh = jax.random.normal(k_hh, (H, H), dtype=jnp.float32) * 0.1
    b = jax.random.normal(k_b, (H,), dtype=jnp.float32) * 0.1

    ref = rnn_sequence_ref(x, w_ih, w_hh, b)

    # Explicit f32 compute path: tight match vs the reference (works on every
    # backend, including the CPU interpreter).
    out_f32 = jax.block_until_ready(
        rnn_sequence(x, w_ih, w_hh, b, compute_dtype=jnp.float32))
    assert out_f32.shape == (B, T, H)
    assert jnp.allclose(out_f32, ref, atol=1e-4, rtol=1e-4)

    # Auto path: bf16 MXU operands on a real TPU (f32 accumulation / state /
    # tanh), f32 everywhere else -> never issues a bf16 dot off-TPU.
    out_auto = jax.block_until_ready(rnn_sequence(x, w_ih, w_hh, b))
    assert out_auto.shape == (B, T, H)
    tol = 1e-4 if _default_compute_dtype() == jnp.float32 else 5e-2
    assert jnp.allclose(out_auto, ref, atol=tol, rtol=tol)

    print("KERNEL_OK")
</pallas_src>

<mosaic_0001>
module attributes {stable_mosaic.version = 11 : i64} {
  func.func @_rnn_seq_kernel(%arg0: i32, %arg1: i32, %arg2: memref<8x8x32xf32, #tpu.memory_space<vmem>>, %arg3: memref<32x128xf32, #tpu.memory_space<vmem>>, %arg4: memref<128x128xf32, #tpu.memory_space<vmem>>, %arg5: memref<1x128xf32, #tpu.memory_space<vmem>>, %arg6: memref<8x8x128xf32, #tpu.memory_space<vmem>>, %arg7: memref<8x8x128xf32, #tpu.memory_space<vmem>>, %arg8: memref<8x128xf32, #tpu.memory_space<vmem>>) attributes {dimension_semantics = [#tpu.dimension_semantics<parallel>, #tpu.dimension_semantics<arbitrary>], iteration_bounds = array<i64: 1, 1>, scalar_prefetch = 0 : i64, scratch_operands = 2 : i64, tpu.core_type = #tpu.core_type<tc>, window_params = [{transform_indices = @transform_0, window_bounds = array<i64: 8, 8, 32>}, {pipeline_mode = #tpu.pipeline_mode<synchronous>, transform_indices = @transform_1, window_bounds = array<i64: 32, 128>}, {pipeline_mode = #tpu.pipeline_mode<synchronous>, transform_indices = @transform_2, window_bounds = array<i64: 128, 128>}, {pipeline_mode = #tpu.pipeline_mode<synchronous>, transform_indices = @transform_3, window_bounds = array<i64: 1, 128>}, {transform_indices = @transform_4, window_bounds = array<i64: 8, 8, 128>}]} {
    %c0_i32 = arith.constant 0 : i32
    %0 = arith.cmpi eq, %arg1, %c0_i32 : i32
    %1 = arith.extui %0 : i1 to i32
    %c0_i32_0 = arith.constant 0 : i32
    %2 = arith.cmpi ne, %1, %c0_i32_0 : i32
    scf.if %2 {
      %cst_57 = arith.constant 0.000000e+00 : f32
      %95 = vector.broadcast %cst_57 : f32 to vector<8x128xf32>
      %c0_58 = arith.constant 0 : index
      %c0_59 = arith.constant 0 : index
      %96 = vector.load %arg8[%c0_58, %c0_59] : memref<8x128xf32, #tpu.memory_space<vmem>>, vector<8x128xf32>
      tpu.vector_store %arg8[%c0_58, %c0_59], %95 {strides = array<i32>} : memref<8x128xf32, #tpu.memory_space<vmem>>, vector<8x128xf32>,
    } else {
    }
    %c0 = arith.constant 0 : index
    %c0_1 = arith.constant 0 : index
    %c0_2 = arith.constant 0 : index
    %3 = vector.load %arg2[%c0, %c0_1, %c0_2] : memref<8x8x32xf32, #tpu.memory_space<vmem>>, vector<8x8x32xf32>
    %4 = vector.shape_cast %3 : vector<8x8x32xf32> to vector<64x32xf32>
    %c0_3 = arith.constant 0 : index
    %c0_4 = arith.constant 0 : index
    %5 = vector.load %arg3[%c0_3, %c0_4] : memref<32x128xf32, #tpu.memory_space<vmem>>, vector<32x128xf32>
    %cst = arith.constant dense<0.000000e+00> : vector<64x128xf32>
    %6 = tpu.matmul %4, %5, %cst {dimension_numbers = #tpu.dot_dimension_numbers<[1], [0], [0], [1], [0, 0, 1, 1], [], []>} : vector<64x32xf32>, vector<32x128xf32>, vector<64x128xf32> -> vector<64x128xf32>
    %c0_5 = arith.constant 0 : index
    %c0_6 = arith.constant 0 : index
    %7 = vector.load %arg5[%c0_5, %c0_6] : memref<1x128xf32, #tpu.memory_space<vmem>>, vector<1x128xf32>
    %8 = vector.broadcast %7 : vector<1x128xf32> to vector<64x128xf32>
    %9 = arith.addf %6, %8 : vector<64x128xf32>
    %10 = vector.shape_cast %9 : vector<64x128xf32> to vector<8x8x128xf32>
    %c0_7 = arith.constant 0 : index
    %c0_8 = arith.constant 0 : index
    %c0_9 = arith.constant 0 : index
    %11 = vector.load %arg7[%c0_7, %c0_8, %c0_9] : memref<8x8x128xf32, #tpu.memory_space<vmem>>, vector<8x8x128xf32>
    tpu.vector_store %arg7[%c0_7, %c0_8, %c0_9], %10 {strides = array<i32>} : memref<8x8x128xf32, #tpu.memory_space<vmem>>, vector<8x8x128xf32>,
    %c0_10 = arith.constant 0 : index
    %c0_11 = arith.constant 0 : index
    %12 = vector.load %arg4[%c0_10, %c0_11] : memref<128x128xf32, #tpu.memory_space<vmem>>, vector<128x128xf32>
    %c0_12 = arith.constant 0 : index
    %c0_13 = arith.constant 0 : index
    %13 = vector.load %arg8[%c0_12, %c0_13] : memref<8x128xf32, #tpu.memory_space<vmem>>, vector<8x128xf32>
    %c0_i32_14 = arith.constant 0 : i32
    %cst_15 = arith.constant dense<0.000000e+00> : vector<8x128xf32>
    %14 = tpu.matmul %13, %12, %cst_15 {dimension_numbers = #tpu.dot_dimension_numbers<[1], [0], [0], [1], [0, 0, 1, 1], [], []>} : vector<8x128xf32>, vector<128x128xf32>, vector<8x128xf32> -> vector<8x128xf32>
    %15 = arith.index_cast %c0_i32_14 : i32 to index
    %c0_16 = arith.constant 0 : index
    %c0_17 = arith.constant 0 : index
    %16 = vector.load %arg7[%15, %c0_16, %c0_17] : memref<8x8x128xf32, #tpu.memory_space<vmem>>, vector<1x8x128xf32>
    %17 = vector.shape_cast %16 : vector<1x8x128xf32> to vector<8x128xf32>
    %18 = arith.addf %14, %17 : vector<8x128xf32>
    %19 = math.tanh %18 : vector<8x128xf32>
    %20 = arith.index_cast %c0_i32_14 : i32 to index
    %c0_18 = arith.constant 0 : index
    %c0_19 = arith.constant 0 : index
    %21 = vector.load %arg6[%20, %c0_18, %c0_19] : memref<8x8x128xf32, #tpu.memory_space<vmem>>, vector<1x8x128xf32>
    %22 = vector.shape_cast %21 : vector<1x8x128xf32> to vector<8x128xf32>
    %23 = vector.shape_cast %19 : vector<8x128xf32> to vector<1x8x128xf32>
    tpu.vector_store %arg6[%20, %c0_18, %c0_19], %23 {strides = array<i32>} : memref<8x8x128xf32, #tpu.memory_space<vmem>>, vector<1x8x128xf32>,
    %c1_i32 = arith.constant 1 : i32
    %cst_20 = arith.constant dense<0.000000e+00> : vector<8x128xf32>
    %24 = tpu.matmul %19, %12, %cst_20 {dimension_numbers = #tpu.dot_dimension_numbers<[1], [0], [0], [1], [0, 0, 1, 1], [], []>} : vector<8x128xf32>, vector<128x128xf32>, vector<8x128xf32> -> vector<8x128xf32>
    %25 = arith.index_cast %c1_i32 : i32 to index
    %c0_21 = arith.constant 0 : index
    %c0_22 = arith.constant 0 : index
    %26 = vector.load %arg7[%25, %c0_21, %c0_22] : memref<8x8x128xf32, #tpu.memory_space<vmem>>, vector<1x8x128xf32>
    %27 = vector.shape_cast %26 : vector<1x8x128xf32> to vector<8x128xf32>
    %28 = arith.addf %24, %27 : vector<8x128xf32>
    %29 = math.tanh %28 : vector<8x128xf32>
    %30 = arith.index_cast %c1_i32 : i32 to index
    %c0_23 = arith.constant 0 : index
    %c0_24 = arith.constant 0 : index
    %31 = vector.load %arg6[%30, %c0_23, %c0_24] : memref<8x8x128xf32, #tpu.memory_space<vmem>>, vector<1x8x128xf32>
    %32 = vector.shape_cast %31 : vector<1x8x128xf32> to vector<8x128xf32>
    %33 = vector.shape_cast %29 : vector<8x128xf32> to vector<1x8x128xf32>
    tpu.vector_store %arg6[%30, %c0_23, %c0_24], %33 {strides = array<i32>} : memref<8x8x128xf32, #tpu.memory_space<vmem>>, vector<1x8x128xf32>,
    %c2_i32 = arith.constant 2 : i32
    %cst_25 = arith.constant dense<0.000000e+00> : vector<8x128xf32>
    %34 = tpu.matmul %29, %12, %cst_25 {dimension_numbers = #tpu.dot_dimension_numbers<[1], [0], [0], [1], [0, 0, 1, 1], [], []>} : vector<8x128xf32>, vector<128x128xf32>, vector<8x128xf32> -> vector<8x128xf32>
    %35 = arith.index_cast %c2_i32 : i32 to index
    %c0_26 = arith.constant 0 : index
    %c0_27 = arith.constant 0 : index
    %36 = vector.load %arg7[%35, %c0_26, %c0_27] : memref<8x8x128xf32, #tpu.memory_space<vmem>>, vector<1x8x128xf32>
    %37 = vector.shape_cast %36 : vector<1x8x128xf32> to vector<8x128xf32>
    %38 = arith.addf %34, %37 : vector<8x128xf32>
    %39 = math.tanh %38 : vector<8x128xf32>
    %40 = arith.index_cast %c2_i32 : i32 to index
    %c0_28 = arith.constant 0 : index
    %c0_29 = arith.constant 0 : index
    %41 = vector.load %arg6[%40, %c0_28, %c0_29] : memref<8x8x128xf32, #tpu.memory_space<vmem>>, vector<1x8x128xf32>
    %42 = vector.shape_cast %41 : vector<1x8x128xf32> to vector<8x128xf32>
    %43 = vector.shape_cast %39 : vector<8x128xf32> to vector<1x8x128xf32>
    tpu.vector_store %arg6[%40, %c0_28, %c0_29], %43 {strides = array<i32>} : memref<8x8x128xf32, #tpu.memory_space<vmem>>, vector<1x8x128xf32>,
    %c3_i32 = arith.constant 3 : i32
    %cst_30 = arith.constant dense<0.000000e+00> : vector<8x128xf32>
    %44 = tpu.matmul %39, %12, %cst_30 {dimension_numbers = #tpu.dot_dimension_numbers<[1], [0], [0], [1], [0, 0, 1, 1], [], []>} : vector<8x128xf32>, vector<128x128xf32>, vector<8x128xf32> -> vector<8x128xf32>
    %45 = arith.index_cast %c3_i32 : i32 to index
    %c0_31 = arith.constant 0 : index
    %c0_32 = arith.constant 0 : index
    %46 = vector.load %arg7[%45, %c0_31, %c0_32] : memref<8x8x128xf32, #tpu.memory_space<vmem>>, vector<1x8x128xf32>
    %47 = vector.shape_cast %46 : vector<1x8x128xf32> to vector<8x128xf32>
    %48 = arith.addf %44, %47 : vector<8x128xf32>
    %49 = math.tanh %48 : vector<8x128xf32>
    %50 = arith.index_cast %c3_i32 : i32 to index
    %c0_33 = arith.constant 0 : index
    %c0_34 = arith.constant 0 : index
    %51 = vector.load %arg6[%50, %c0_33, %c0_34] : memref<8x8x128xf32, #tpu.memory_space<vmem>>, vector<1x8x128xf32>
    %52 = vector.shape_cast %51 : vector<1x8x128xf32> to vector<8x128xf32>
    %53 = vector.shape_cast %49 : vector<8x128xf32> to vector<1x8x128xf32>
    tpu.vector_store %arg6[%50, %c0_33, %c0_34], %53 {strides = array<i32>} : memref<8x8x128xf32, #tpu.memory_space<vmem>>, vector<1x8x128xf32>,
    %c4_i32 = arith.constant 4 : i32
    %cst_35 = arith.constant dense<0.000000e+00> : vector<8x128xf32>
    %54 = tpu.matmul %49, %12, %cst_35 {dimension_numbers = #tpu.dot_dimension_numbers<[1], [0], [0], [1], [0, 0, 1, 1], [], []>} : vector<8x128xf32>, vector<128x128xf32>, vector<8x128xf32> -> vector<8x128xf32>
    %55 = arith.index_cast %c4_i32 : i32 to index
    %c0_36 = arith.constant 0 : index
    %c0_37 = arith.constant 0 : index
    %56 = vector.load %arg7[%55, %c0_36, %c0_37] : memref<8x8x128xf32, #tpu.memory_space<vmem>>, vector<1x8x128xf32>
    %57 = vector.shape_cast %56 : vector<1x8x128xf32> to vector<8x128xf32>
    %58 = arith.addf %54, %57 : vector<8x128xf32>
    %59 = math.tanh %58 : vector<8x128xf32>
    %60 = arith.index_cast %c4_i32 : i32 to index
    %c0_38 = arith.constant 0 : index
    %c0_39 = arith.constant 0 : index
    %61 = vector.load %arg6[%60, %c0_38, %c0_39] : memref<8x8x128xf32, #tpu.memory_space<vmem>>, vector<1x8x128xf32>
    %62 = vector.shape_cast %61 : vector<1x8x128xf32> to vector<8x128xf32>
    %63 = vector.shape_cast %59 : vector<8x128xf32> to vector<1x8x128xf32>
    tpu.vector_store %arg6[%60, %c0_38, %c0_39], %63 {strides = array<i32>} : memref<8x8x128xf32, #tpu.memory_space<vmem>>, vector<1x8x128xf32>,
    %c5_i32 = arith.constant 5 : i32
    %cst_40 = arith.constant dense<0.000000e+00> : vector<8x128xf32>
    %64 = tpu.matmul %59, %12, %cst_40 {dimension_numbers = #tpu.dot_dimension_numbers<[1], [0], [0], [1], [0, 0, 1, 1], [], []>} : vector<8x128xf32>, vector<128x128xf32>, vector<8x128xf32> -> vector<8x128xf32>
    %65 = arith.index_cast %c5_i32 : i32 to index
    %c0_41 = arith.constant 0 : index
    %c0_42 = arith.constant 0 : index
    %66 = vector.load %arg7[%65, %c0_41, %c0_42] : memref<8x8x128xf32, #tpu.memory_space<vmem>>, vector<1x8x128xf32>
    %67 = vector.shape_cast %66 : vector<1x8x128xf32> to vector<8x128xf32>
    %68 = arith.addf %64, %67 : vector<8x128xf32>
    %69 = math.tanh %68 : vector<8x128xf32>
    %70 = arith.index_cast %c5_i32 : i32 to index
    %c0_43 = arith.constant 0 : index
    %c0_44 = arith.constant 0 : index
    %71 = vector.load %arg6[%70, %c0_43, %c0_44] : memref<8x8x128xf32, #tpu.memory_space<vmem>>, vector<1x8x128xf32>
    %72 = vector.shape_cast %71 : vector<1x8x128xf32> to vector<8x128xf32>
    %73 = vector.shape_cast %69 : vector<8x128xf32> to vector<1x8x128xf32>
    tpu.vector_store %arg6[%70, %c0_43, %c0_44], %73 {strides = array<i32>} : memref<8x8x128xf32, #tpu.memory_space<vmem>>, vector<1x8x128xf32>,
    %c6_i32 = arith.constant 6 : i32
    %cst_45 = arith.constant dense<0.000000e+00> : vector<8x128xf32>
    %74 = tpu.matmul %69, %12, %cst_45 {dimension_numbers = #tpu.dot_dimension_numbers<[1], [0], [0], [1], [0, 0, 1, 1], [], []>} : vector<8x128xf32>, vector<128x128xf32>, vector<8x128xf32> -> vector<8x128xf32>
    %75 = arith.index_cast %c6_i32 : i32 to index
    %c0_46 = arith.constant 0 : index
    %c0_47 = arith.constant 0 : index
    %76 = vector.load %arg7[%75, %c0_46, %c0_47] : memref<8x8x128xf32, #tpu.memory_space<vmem>>, vector<1x8x128xf32>
    %77 = vector.shape_cast %76 : vector<1x8x128xf32> to vector<8x128xf32>
    %78 = arith.addf %74, %77 : vector<8x128xf32>
    %79 = math.tanh %78 : vector<8x128xf32>
    %80 = arith.index_cast %c6_i32 : i32 to index
    %c0_48 = arith.constant 0 : index
    %c0_49 = arith.constant 0 : index
    %81 = vector.load %arg6[%80, %c0_48, %c0_49] : memref<8x8x128xf32, #tpu.memory_space<vmem>>, vector<1x8x128xf32>
    %82 = vector.shape_cast %81 : vector<1x8x128xf32> to vector<8x128xf32>
    %83 = vector.shape_cast %79 : vector<8x128xf32> to vector<1x8x128xf32>
    tpu.vector_store %arg6[%80, %c0_48, %c0_49], %83 {strides = array<i32>} : memref<8x8x128xf32, #tpu.memory_space<vmem>>, vector<1x8x128xf32>,
    %c7_i32 = arith.constant 7 : i32
    %cst_50 = arith.constant dense<0.000000e+00> : vector<8x128xf32>
    %84 = tpu.matmul %79, %12, %cst_50 {dimension_numbers = #tpu.dot_dimension_numbers<[1], [0], [0], [1], [0, 0, 1, 1], [], []>} : vector<8x128xf32>, vector<128x128xf32>, vector<8x128xf32> -> vector<8x128xf32>
    %85 = arith.index_cast %c7_i32 : i32 to index
    %c0_51 = arith.constant 0 : index
    %c0_52 = arith.constant 0 : index
    %86 = vector.load %arg7[%85, %c0_51, %c0_52] : memref<8x8x128xf32, #tpu.memory_space<vmem>>, vector<1x8x128xf32>
    %87 = vector.shape_cast %86 : vector<1x8x128xf32> to vector<8x128xf32>
    %88 = arith.addf %84, %87 : vector<8x128xf32>
    %89 = math.tanh %88 : vector<8x128xf32>
    %90 = arith.index_cast %c7_i32 : i32 to index
    %c0_53 = arith.constant 0 : index
    %c0_54 = arith.constant 0 : index
    %91 = vector.load %arg6[%90, %c0_53, %c0_54] : memref<8x8x128xf32, #tpu.memory_space<vmem>>, vector<1x8x128xf32>
    %92 = vector.shape_cast %91 : vector<1x8x128xf32> to vector<8x128xf32>
    %93 = vector.shape_cast %89 : vector<8x128xf32> to vector<1x8x128xf32>
    tpu.vector_store %arg6[%90, %c0_53, %c0_54], %93 {strides = array<i32>} : memref<8x8x128xf32, #tpu.memory_space<vmem>>, vector<1x8x128xf32>,
    %c8_i32 = arith.constant 8 : i32
    %c0_55 = arith.constant 0 : index
    %c0_56 = arith.constant 0 : index
    %94 = vector.load %arg8[%c0_55, %c0_56] : memref<8x128xf32, #tpu.memory_space<vmem>>, vector<8x128xf32>
    tpu.vector_store %arg8[%c0_55, %c0_56], %89 {strides = array<i32>} : memref<8x128xf32, #tpu.memory_space<vmem>>, vector<8x128xf32>,
    return
  }
  func.func @transform_0(%arg0: i32, %arg1: i32) -> (i32, i32, i32) {
    %c0_i32 = arith.constant 0 : i32
    %c0_i32_0 = arith.constant 0 : i32
    return %arg1, %arg0, %c0_i32 : i32, i32, i32
  }
  func.func @transform_1(%arg0: i32, %arg1: i32) -> (i32, i32) {
    %c0_i32 = arith.constant 0 : i32
    %c0_i32_0 = arith.constant 0 : i32
    %c0_i32_1 = arith.constant 0 : i32
    return %c0_i32, %c0_i32_0 : i32, i32
  }
  func.func @transform_2(%arg0: i32, %arg1: i32) -> (i32, i32) {
    %c0_i32 = arith.constant 0 : i32
    %c0_i32_0 = arith.constant 0 : i32
    %c0_i32_1 = arith.constant 0 : i32
    return %c0_i32, %c0_i32_0 : i32, i32
  }
  func.func @transform_3(%arg0: i32, %arg1: i32) -> (i32, i32) {
    %c0_i32 = arith.constant 0 : i32
    %c0_i32_0 = arith.constant 0 : i32
    %c0_i32_1 = arith.constant 0 : i32
    return %c0_i32, %c0_i32_0 : i32, i32
  }
  func.func @transform_4(%arg0: i32, %arg1: i32) -> (i32, i32, i32) {
    %c0_i32 = arith.constant 0 : i32
    %c0_i32_0 = arith.constant 0 : i32
    return %arg1, %arg0, %c0_i32 : i32, i32, i32
  }
}

</mosaic_0001>

<llo_original>
// kernel: tpu_custom_call.1
$region0: #{tpu_custom_call.1}
  #allocation0 [shape = 'u32[]', space=smem, size = 0x4, offset = 0x4, fixed_abs, tag = 'smem constant byte address 0x4 - core index']
  #allocation1 [shape = 'u32[144,128]{1,0:T(1,128)}', space=vmem, size = 0x12000, scoped, tag = 'internal scratch']
  #allocation2 [shape = 'f32[8,8,128]{2,1,0:T(8,128)}', space=vmem, size = 0x8000, scoped, tag = 'scratch operand']
  #allocation3 [shape = 'f32[8,128]{1,0:T(8,128)}', space=vmem, size = 0x1000, scoped, tag = 'scratch operand']
  %s0 = inlined_call_operand.hbm [shape: f32[8,8,32], index: 0, kind: input, shape index: {}]
  %s1 = inlined_call_operand.hbm [shape: f32[32,128], index: 1, kind: input, shape index: {}]
  %s2 = inlined_call_operand.hbm [shape: f32[128,128], index: 2, kind: input, shape index: {}]
  %s3 = inlined_call_operand.vmem [shape: f32[1,128], index: 3, kind: input, shape index: {}]
  %s4 = inlined_call_operand.hbm [shape: f32[8,8,128], index: 4, kind: output, shape index: {}]
  %s5 = sld [smem:[#allocation0]]
  $region42: #{tpu_custom_call.1} parent=0
    _
  %s7 = ssub.s32 1, %s5
  %s8 = scalar_select 0, %s7, %s5
  $region1: #{tpu_custom_call.1} parent=0
    #allocation4 [shape = 'u8[32768]{0}', space=vmem, size = 0x8000, scoped, tag = 'input window, operand 0, single buffered']
    #allocation5 [shape = 's32[1]{0}', space=sflag, size = 0x4, scoped, tag = 'scoped memory for tpu_custom_call.1']
    #allocation6 [shape = 's32[1]{0}', space=sflag, size = 0x4, scoped, tag = 'scoped memory for tpu_custom_call.1']
    #allocation7 [shape = 'u8[16384]{0}', space=vmem, size = 0x4000, scoped, tag = 'input window, operand 1, single buffered']
    #allocation8 [shape = 's32[1]{0}', space=sflag, size = 0x4, scoped, tag = 'scoped memory for tpu_custom_call.1']
    #allocation9 [shape = 'u8[65536]{0}', space=vmem, size = 0x10000, scoped, tag = 'input window, operand 2, single buffered']
    #allocation10 [shape = 'u8[32768]{0}', space=vmem, size = 0x8000, scoped, tag = 'output window, operand 0, single buffered']
    %9 = vsyncpa [#allocation5], 0
    %10 = vsyncpa [#allocation8], 0
    %11 = vsyncpa [#allocation6], 0
    // Predicated region
    $region2: #{tpu_custom_call.1} parent=1 // pred_check
      _
    $region3: #{tpu_custom_call.1} parent=1 // pred_check_branch
      %13 = sbr.rel (0) target = $region5
    $region4: #{tpu_custom_call.1} parent=1 // pred_region
      %s15 = ssub.s32 1024, 1024
      %16 = vsyncadd [#allocation5], %s15
      %s17 = sshll.u32 [#allocation4], 4
      %s18 = int_to_ptr.vmem [resolvable:$true] %s17
      %23 = dma.hbm_to_vmem [thread:$0]  %s0, 1024, %s18, [#allocation5], 128, 128, 8
    $region5: #{tpu_custom_call.1} parent=1 // pred_fallthru
      _
    // Predicated region
    $region6: #{tpu_custom_call.1} parent=1 // pred_check
      _
    $region7: #{tpu_custom_call.1} parent=1 // pred_check_branch
      %25 = sbr.rel (0) target = $region9
    $region8: #{tpu_custom_call.1} parent=1 // pred_region
      %s27 = ssub.s32 512, 512
      %28 = vsyncadd [#allocation8], %s27
      %s29 = sshll.u32 [#allocation7], 4
      %s30 = int_to_ptr.vmem [resolvable:$true] %s29
      %35 = dma.hbm_to_vmem [thread:$0]  %s1, 512, %s30, [#allocation8], 128, 128, 8
    $region9: #{tpu_custom_call.1} parent=1 // pred_fallthru
      _
    // Predicated region
    $region10: #{tpu_custom_call.1} parent=1 // pred_check
      _
    $region11: #{tpu_custom_call.1} parent=1 // pred_check_branch
      %37 = sbr.rel (0) target = $region13
    $region12: #{tpu_custom_call.1} parent=1 // pred_region
      %s39 = ssub.s32 2048, 2048
      %40 = vsyncadd [#allocation8], %s39
      %s41 = sshll.u32 [#allocation9], 4
      %s42 = int_to_ptr.vmem [resolvable:$true] %s41
      %47 = dma.hbm_to_vmem [thread:$0]  %s2, 2048, %s42, [#allocation8], 128, 128, 8
    $region13: #{tpu_custom_call.1} parent=1 // pred_fallthru
      _
    // Predicated region
    $region14: #{tpu_custom_call.1} parent=1 // pred_check
      _
    $region15: #{tpu_custom_call.1} parent=1 // pred_check_branch
      %49 = sbr.rel (0) target = $region17
    $region16: #{tpu_custom_call.1} parent=1 // pred_region
      _
    $region17: #{tpu_custom_call.1} parent=1 // pred_fallthru
      _
    // Predicated region
    $region18: #{tpu_custom_call.1} parent=1 // pred_check
      _
    $region19: #{tpu_custom_call.1} parent=1 // pred_check_branch
      %51 = sbr.rel (0) target = $region21
    $region20: #{tpu_custom_call.1} parent=1 // pred_region
      %52 = dma.done [#allocation5], 1024
    $region21: #{tpu_custom_call.1} parent=1 // pred_fallthru
      _
    // Predicated region
    $region22: #{tpu_custom_call.1} parent=1 // pred_check
      _
    $region23: #{tpu_custom_call.1} parent=1 // pred_check_branch
      %54 = sbr.rel (0) target = $region25
    $region24: #{tpu_custom_call.1} parent=1 // pred_region
      %55 = dma.done [#allocation8], 512
    $region25: #{tpu_custom_call.1} parent=1 // pred_fallthru
      _
    // Predicated region
    $region26: #{tpu_custom_call.1} parent=1 // pred_check
      _
    $region27: #{tpu_custom_call.1} parent=1 // pred_check_branch
      %57 = sbr.rel (0) target = $region29
    $region28: #{tpu_custom_call.1} parent=1 // pred_region
      %58 = dma.done [#allocation8], 2048
    $region29: #{tpu_custom_call.1} parent=1 // pred_fallthru
      _
    %p59 = scmp.eq.s32.totalorder 0, 0
    // Predicated region
    $region30: #{tpu_custom_call.1} parent=1 // pred_check
      %p60 = pneg %p59
    $region31: #{tpu_custom_call.1} parent=1 // pred_check_branch
      %62 = sbr.rel (%p60) target = $region33
    $region32: #{tpu_custom_call.1} parent=1 // pred_region
      %63 = vst [vmem:[#allocation3] sm:$0xff] 0.0
    $region33: #{tpu_custom_call.1} parent=1 // pred_fallthru
      _
    %v64 = vld [vmem:[#allocation4] sm:$0xff]
    %v65 = vld [vmem:[#allocation4 + $0x8] sm:$0xff]
    %v66 = vld [vmem:[#allocation4 + $0x10] sm:$0xff]
    %v67 = vld [vmem:[#allocation4 + $0x18] sm:$0xff]
    %v68 = vld [vmem:[#allocation4 + $0x20] sm:$0xff]
    %v69 = vld [vmem:[#allocation4 + $0x28] sm:$0xff]
    %v70 = vld [vmem:[#allocation4 + $0x30] sm:$0xff]
    %v71 = vld [vmem:[#allocation4 + $0x38] sm:$0xff]
    %v72 = vld [vmem:[#allocation7] sm:$0xff]
    %v73 = vld [vmem:[#allocation7 + $0x8] sm:$0xff]
    %v74 = vld [vmem:[#allocation7 + $0x10] sm:$0xff]
    %v75 = vld [vmem:[#allocation7 + $0x18] sm:$0xff]
    %v76 = vld [vmem:[%s3] sm:$0x1]
    %v78 = vlaneseq
    %v79 = vshrl.u32 %v78, 7
    %v80 = vsub.s32 0, %v79
    %v81 = vrot.slane %v76, %v80
    %vm83 = vcmask 261120
    %v85 = vsel %vm83, %v64, 0
    %v88 = vsel %vm83, %v65, 0
    %v91 = vsel %vm83, %v66, 0
    %v94 = vsel %vm83, %v67, 0
    %v97 = vsel %vm83, %v68, 0
    %v100 = vsel %vm83, %v69, 0
    %v103 = vsel %vm83, %v70, 0
    %v106 = vsel %vm83, %v71, 0
    %108 = vmatprep.subr.mxu0 0.0
    %109 = vmatpush1.msra.mxu0 %v72
    %110 = vmatprep.subr.mxu0 0.0
    %111 = vmatpush1.msra.mxu0 %v73
    %112 = vmatprep.subr.mxu0 0.0
    %113 = vmatpush1.msra.mxu0 %v74
    %114 = vmatprep.subr.mxu0 0.0
    %115 = vmatpush1.msra.mxu0 %v75
    %116 = vmatprep.subr.mxu0 0.0
    %117 = vmatpush1.msra.mxu0 0.0
    %118 = vmatprep.subr.mxu0 0.0
    %119 = vmatpush1.msra.mxu0 0.0
    %120 = vmatprep.subr.mxu0 0.0
    %121 = vmatpush1.msra.mxu0 0.0
    %122 = vmatprep.subr.mxu0 0.0
    %123 = vmatpush1.msra.mxu0 0.0
    %124 = vmatprep.subr.mxu0 0.0
    %125 = vmatpush1.msra.mxu0 0.0
    %126 = vmatprep.subr.mxu0 0.0
    %127 = vmatpush1.msra.mxu0 0.0
    %128 = vmatprep.subr.mxu0 0.0
    %129 = vmatpush1.msra.mxu0 0.0
    %130 = vmatprep.subr.mxu0 0.0
    %131 = vmatpush1.msra.mxu0 0.0
    %132 = vmatprep.subr.mxu0 0.0
    %133 = vmatpush1.msra.mxu0 0.0
    %134 = vmatprep.subr.mxu0 0.0
    %135 = vmatpush1.msra.mxu0 0.0
    %136 = vmatprep.subr.mxu0 0.0
    %137 = vmatpush1.msra.mxu0 0.0
    %138 = vmatprep.subr.mxu0 0.0
    %139 = vmatpush1.msra.mxu0 0.0
    %140 = vmatprep.subr.mxu0 0.0
    %141 = vmatpush1.msra.mxu0 0.0
    %142 = vmatprep.subr.mxu0 0.0
    %143 = vmatpush1.msra.mxu0 0.0
    %144 = vmatprep.subr.mxu0 0.0
    %145 = vmatpush1.msra.mxu0 0.0
    %146 = vmatprep.subr.mxu0 0.0
    %147 = vmatpush1.msra.mxu0 0.0
    %148 = vmatprep.subr.mxu0 0.0
    %149 = vmatpush1.msra.mxu0 0.0
    %150 = vmatprep.subr.mxu0 0.0
    %151 = vmatpush1.msra.mxu0 0.0
    %152 = vmatprep.subr.mxu0 0.0
    %153 = vmatpush1.msra.mxu0 0.0
    %154 = vmatprep.subr.mxu0 0.0
    %155 = vmatpush1.msra.mxu0 0.0
    %156 = vmatprep.subr.mxu0 0.0
    %157 = vmatpush1.msra.mxu0 0.0
    %158 = vmatprep.subr.mxu0 0.0
    %159 = vmatpush1.msra.mxu0 0.0
    %160 = vmatprep.subr.mxu0 0.0
    %161 = vmatpush1.msra.mxu0 0.0
    %162 = vmatprep.subr.mxu0 0.0
    %163 = vmatpush1.msra.mxu0 0.0
    %164 = vmatprep.subr.mxu0 0.0
    %165 = vmatpush1.msra.mxu0 0.0
    %166 = vmatprep.subr.mxu0 0.0
    %167 = vmatpush1.msra.mxu0 0.0
    %168 = vmatprep.subr.mxu0 0.0
    %169 = vmatpush1.msra.mxu0 0.0
    %170 = vmatprep.subr.mxu0 0.0
    %171 = vmatpush1.msra.mxu0 0.0
    %172 = vmatprep.mubr.f32.mxu0 0.0
    %173 = vmatmul.mubr.f32.gmra.mrb[0].mxu0 %v85
    %v174 = vpop.f32.mrb[0].mxu0
    %v175 = vadd.f32 %v81, %v174
    %v176 = vpop.f32.mrb[0].mxu0
    %177 = vmatprep.mubr.f32.mxu0 0.0
    %178 = vmatmul.mubr.f32.gmra.mrb[0].mxu0 %v88
    %v179 = vpop.f32.mrb[0].mxu0
    %v180 = vadd.f32 %v81, %v179
    %v181 = vpop.f32.mrb[0].mxu0
    %182 = vmatprep.mubr.f32.mxu0 0.0
    %183 = vmatmul.mubr.f32.gmra.mrb[0].mxu0 %v91
    %v184 = vpop.f32.mrb[0].mxu0
    %v185 = vadd.f32 %v81, %v184
    %v186 = vpop.f32.mrb[0].mxu0
    %187 = vmatprep.mubr.f32.mxu0 0.0
    %188 = vmatmul.mubr.f32.gmra.mrb[0].mxu0 %v94
    %v189 = vpop.f32.mrb[0].mxu0
    %v190 = vadd.f32 %v81, %v189
    %v191 = vpop.f32.mrb[0].mxu0
    %192 = vmatprep.mubr.f32.mxu0 0.0
    %193 = vmatmul.mubr.f32.gmra.mrb[0].mxu0 %v97
    %v194 = vpop.f32.mrb[0].mxu0
    %v195 = vadd.f32 %v81, %v194
    %v196 = vpop.f32.mrb[0].mxu0
    %197 = vmatprep.mubr.f32.mxu0 0.0
    %198 = vmatmul.mubr.f32.gmra.mrb[0].mxu0 %v100
    %v199 = vpop.f32.mrb[0].mxu0
    %v200 = vadd.f32 %v81, %v199
    %v201 = vpop.f32.mrb[0].mxu0
    %202 = vmatprep.mubr.f32.mxu0 0.0
    %203 = vmatmul.mubr.f32.gmra.mrb[0].mxu0 %v103
    %v204 = vpop.f32.mrb[0].mxu0
    %v205 = vadd.f32 %v81, %v204
    %v206 = vpop.f32.mrb[0].mxu0
    %207 = vmatprep.mubr.f32.mxu0 0.0
    %208 = vmatmul.mubr.f32.gmra.mrb[0].mxu0 %v106
    %v209 = vpop.f32.mrb[0].mxu0
    %v210 = vadd.f32 %v81, %v209
    %v211 = vpop.f32.mrb[0].mxu0
    %212 = vdwg.mxu0
    %213 = vst [vmem:[#allocation2] sm:$0xff] %v175
    %214 = vst [vmem:[#allocation2 + $0x8] sm:$0xff] %v180
    %215 = vst [vmem:[#allocation2 + $0x10] sm:$0xff] %v185
    %216 = vst [vmem:[#allocation2 + $0x18] sm:$0xff] %v190
    %217 = vst [vmem:[#allocation2 + $0x20] sm:$0xff] %v195
    %218 = vst [vmem:[#allocation2 + $0x28] sm:$0xff] %v200
    %219 = vst [vmem:[#allocation2 + $0x30] sm:$0xff] %v205
    %220 = vst [vmem:[#allocation2 + $0x38] sm:$0xff] %v210
    %v221 = vld [vmem:[#allocation9] sm:$0xff]
    %v222 = vld [vmem:[#allocation9 + $0x8] sm:$0xff]
    %v223 = vld [vmem:[#allocation9 + $0x10] sm:$0xff]
    %v224 = vld [vmem:[#allocation9 + $0x18] sm:$0xff]
    %v225 = vld [vmem:[#allocation9 + $0x20] sm:$0xff]
    %v226 = vld [vmem:[#allocation9 + $0x28] sm:$0xff]
    %v227 = vld [vmem:[#allocation9 + $0x30] sm:$0xff]
    %v228 = vld [vmem:[#allocation9 + $0x38] sm:$0xff]
    %v229 = vld [vmem:[#allocation9 + $0x40] sm:$0xff]
    %v230 = vld [vmem:[#allocation9 + $0x48] sm:$0xff]
    %v231 = vld [vmem:[#allocation9 + $0x50] sm:$0xff]
    %v232 = vld [vmem:[#allocation9 + $0x58] sm:$0xff]
    %v233 = vld [vmem:[#allocation9 + $0x60] sm:$0xff]
    %v234 = vld [vmem:[#allocation9 + $0x68] sm:$0xff]
    %v235 = vld [vmem:[#allocation9 + $0x70] sm:$0xff]
    %v236 = vld [vmem:[#allocation9 + $0x78] sm:$0xff]
    %v237 = vld [vmem:[#allocation3] sm:$0xff]
    %v238 = vld [vmem:[#allocation2] sm:$0xff]
    %239 = vmatprep.subr.mxu0 0.0
    %240 = vmatpush1.msra.mxu0 %v221
    %241 = vmatprep.subr.mxu0 0.0
    %242 = vmatpush1.msra.mxu0 %v222
    %243 = vmatprep.subr.mxu0 0.0
    %244 = vmatpush1.msra.mxu0 %v223
    %245 = vmatprep.subr.mxu0 0.0
    %246 = vmatpush1.msra.mxu0 %v224
    %247 = vmatprep.subr.mxu0 0.0
    %248 = vmatpush1.msra.mxu0 %v225
    %249 = vmatprep.subr.mxu0 0.0
    %250 = vmatpush1.msra.mxu0 %v226
    %251 = vmatprep.subr.mxu0 0.0
    %252 = vmatpush1.msra.mxu0 %v227
    %253 = vmatprep.subr.mxu0 0.0
    %254 = vmatpush1.msra.mxu0 %v228
    %255 = vmatprep.subr.mxu0 0.0
    %256 = vmatpush1.msra.mxu0 %v229
    %257 = vmatprep.subr.mxu0 0.0
    %258 = vmatpush1.msra.mxu0 %v230
    %259 = vmatprep.subr.mxu0 0.0
    %260 = vmatpush1.msra.mxu0 %v231
    %261 = vmatprep.subr.mxu0 0.0
    %262 = vmatpush1.msra.mxu0 %v232
    %263 = vmatprep.subr.mxu0 0.0
    %264 = vmatpush1.msra.mxu0 %v233
    %265 = vmatprep.subr.mxu0 0.0
    %266 = vmatpush1.msra.mxu0 %v234
    %267 = vmatprep.subr.mxu0 0.0
    %268 = vmatpush1.msra.mxu0 %v235
    %269 = vmatprep.subr.mxu0 0.0
    %270 = vmatpush1.msra.mxu0 %v236
    %271 = vmatprep.subr.mxu0 0.0
    %272 = vmatpush1.msra.mxu0 0.0
    %273 = vmatprep.subr.mxu0 0.0
    %274 = vmatpush1.msra.mxu0 0.0
    %275 = vmatprep.subr.mxu0 0.0
    %276 = vmatpush1.msra.mxu0 0.0
    %277 = vmatprep.subr.mxu0 0.0
    %278 = vmatpush1.msra.mxu0 0.0
    %279 = vmatprep.subr.mxu0 0.0
    %280 = vmatpush1.msra.mxu0 0.0
    %281 = vmatprep.subr.mxu0 0.0
    %282 = vmatpush1.msra.mxu0 0.0
    %283 = vmatprep.subr.mxu0 0.0
    %284 = vmatpush1.msra.mxu0 0.0
    %285 = vmatprep.subr.mxu0 0.0
    %286 = vmatpush1.msra.mxu0 0.0
    %287 = vmatprep.subr.mxu0 0.0
    %288 = vmatpush1.msra.mxu0 0.0
    %289 = vmatprep.subr.mxu0 0.0
    %290 = vmatpush1.msra.mxu0 0.0
    %291 = vmatprep.subr.mxu0 0.0
    %292 = vmatpush1.msra.mxu0 0.0
    %293 = vmatprep.subr.mxu0 0.0
    %294 = vmatpush1.msra.mxu0 0.0
    %295 = vmatprep.subr.mxu0 0.0
    %296 = vmatpush1.msra.mxu0 0.0
    %297 = vmatprep.subr.mxu0 0.0
    %298 = vmatpush1.msra.mxu0 0.0
    %299 = vmatprep.subr.mxu0 0.0
    %300 = vmatpush1.msra.mxu0 0.0
    %301 = vmatprep.subr.mxu0 0.0
    %302 = vmatpush1.msra.mxu0 0.0
    %303 = vmatprep.mubr.f32.mxu0 0.0
    %304 = vmatmul.mubr.f32.gmra.mrb[0].mxu0 %v237
    %v305 = vpop.f32.mrb[0].mxu0
    %v306 = vadd.f32 %v238, %v305
    %v307 = vpop.f32.mrb[0].mxu0
    %308 = vdwg.mxu0
    %v309 = vtanh.pop %v306
    %310 = vst [vmem:[#allocation10] sm:$0xff] %v309
    %s311 = scalar_lea.vmem [#allocation2], 8
    %v312 = vld [vmem:[%s311] sm:$0xff]
    %313 = vmatprep.subr.mxu0 0.0
    %314 = vmatpush1.msra.mxu0 %v221
    %315 = vmatprep.subr.mxu0 0.0
    %316 = vmatpush1.msra.mxu0 %v222
    %317 = vmatprep.subr.mxu0 0.0
    %318 = vmatpush1.msra.mxu0 %v223
    %319 = vmatprep.subr.mxu0 0.0
    %320 = vmatpush1.msra.mxu0 %v224
    %321 = vmatprep.subr.mxu0 0.0
    %322 = vmatpush1.msra.mxu0 %v225
    %323 = vmatprep.subr.mxu0 0.0
    %324 = vmatpush1.msra.mxu0 %v226
    %325 = vmatprep.subr.mxu0 0.0
    %326 = vmatpush1.msra.mxu0 %v227
    %327 = vmatprep.subr.mxu0 0.0
    %328 = vmatpush1.msra.mxu0 %v228
    %329 = vmatprep.subr.mxu0 0.0
    %330 = vmatpush1.msra.mxu0 %v229
    %331 = vmatprep.subr.mxu0 0.0
    %332 = vmatpush1.msra.mxu0 %v230
    %333 = vmatprep.subr.mxu0 0.0
    %334 = vmatpush1.msra.mxu0 %v231
    %335 = vmatprep.subr.mxu0 0.0
    %336 = vmatpush1.msra.mxu0 %v232
    %337 = vmatprep.subr.mxu0 0.0
    %338 = vmatpush1.msra.mxu0 %v233
    %339 = vmatprep.subr.mxu0 0.0
    %340 = vmatpush1.msra.mxu0 %v234
    %341 = vmatprep.subr.mxu0 0.0
    %342 = vmatpush1.msra.mxu0 %v235
    %343 = vmatprep.subr.mxu0 0.0
    %344 = vmatpush1.msra.mxu0 %v236
    %345 = vmatprep.subr.mxu0 0.0
    %346 = vmatpush1.msra.mxu0 0.0
    %347 = vmatprep.subr.mxu0 0.0
    %348 = vmatpush1.msra.mxu0 0.0
    %349 = vmatprep.subr.mxu0 0.0
    %350 = vmatpush1.msra.mxu0 0.0
    %351 = vmatprep.subr.mxu0 0.0
    %352 = vmatpush1.msra.mxu0 0.0
    %353 = vmatprep.subr.mxu0 0.0
    %354 = vmatpush1.msra.mxu0 0.0
    %355 = vmatprep.subr.mxu0 0.0
    %356 = vmatpush1.msra.mxu0 0.0
    %357 = vmatprep.subr.mxu0 0.0
    %358 = vmatpush1.msra.mxu0 0.0
    %359 = vmatprep.subr.mxu0 0.0
    %360 = vmatpush1.msra.mxu0 0.0
    %361 = vmatprep.subr.mxu0 0.0
    %362 = vmatpush1.msra.mxu0 0.0
    %363 = vmatprep.subr.mxu0 0.0
    %364 = vmatpush1.msra.mxu0 0.0
    %365 = vmatprep.subr.mxu0 0.0
    %366 = vmatpush1.msra.mxu0 0.0
    %367 = vmatprep.subr.mxu0 0.0
    %368 = vmatpush1.msra.mxu0 0.0
    %369 = vmatprep.subr.mxu0 0.0
    %370 = vmatpush1.msra.mxu0 0.0
    %371 = vmatprep.subr.mxu0 0.0
    %372 = vmatpush1.msra.mxu0 0.0
    %373 = vmatprep.subr.mxu0 0.0
    %374 = vmatpush1.msra.mxu0 0.0
    %375 = vmatprep.subr.mxu0 0.0
    %376 = vmatpush1.msra.mxu0 0.0
    %377 = vmatprep.mubr.f32.mxu0 0.0
    %378 = vmatmul.mubr.f32.gmra.mrb[0].mxu0 %v309
    %v379 = vpop.f32.mrb[0].mxu0
    %v380 = vadd.f32 %v312, %v379
    %v381 = vpop.f32.mrb[0].mxu0
    %382 = vdwg.mxu0
    %v383 = vtanh.pop %v380
    %s384 = scalar_lea.vmem [#allocation10], 8
    %385 = vst [vmem:[%s384] sm:$0xff] %v383
    %s386 = scalar_lea.vmem [#allocation2], 16
    %v387 = vld [vmem:[%s386] sm:$0xff]
    %388 = vmatprep.subr.mxu0 0.0
    %389 = vmatpush1.msra.mxu0 %v221
    %390 = vmatprep.subr.mxu0 0.0
    %391 = vmatpush1.msra.mxu0 %v222
    %392 = vmatprep.subr.mxu0 0.0
    %393 = vmatpush1.msra.mxu0 %v223
    %394 = vmatprep.subr.mxu0 0.0
    %395 = vmatpush1.msra.mxu0 %v224
    %396 = vmatprep.subr.mxu0 0.0
    %397 = vmatpush1.msra.mxu0 %v225
    %398 = vmatprep.subr.mxu0 0.0
    %399 = vmatpush1.msra.mxu0 %v226
    %400 = vmatprep.subr.mxu0 0.0
    %401 = vmatpush1.msra.mxu0 %v227
    %402 = vmatprep.subr.mxu0 0.0
    %403 = vmatpush1.msra.mxu0 %v228
    %404 = vmatprep.subr.mxu0 0.0
    %405 = vmatpush1.msra.mxu0 %v229
    %406 = vmatprep.subr.mxu0 0.0
    %407 = vmatpush1.msra.mxu0 %v230
    %408 = vmatprep.subr.mxu0 0.0
    %409 = vmatpush1.msra.mxu0 %v231
    %410 = vmatprep.subr.mxu0 0.0
    %411 = vmatpush1.msra.mxu0 %v232
    %412 = vmatprep.subr.mxu0 0.0
    %413 = vmatpush1.msra.mxu0 %v233
    %414 = vmatprep.subr.mxu0 0.0
    %415 = vmatpush1.msra.mxu0 %v234
    %416 = vmatprep.subr.mxu0 0.0
    %417 = vmatpush1.msra.mxu0 %v235
    %418 = vmatprep.subr.mxu0 0.0
    %419 = vmatpush1.msra.mxu0 %v236
    %420 = vmatprep.subr.mxu0 0.0
    %421 = vmatpush1.msra.mxu0 0.0
    %422 = vmatprep.subr.mxu0 0.0
    %423 = vmatpush1.msra.mxu0 0.0
    %424 = vmatprep.subr.mxu0 0.0
    %425 = vmatpush1.msra.mxu0 0.0
    %426 = vmatprep.subr.mxu0 0.0
    %427 = vmatpush1.msra.mxu0 0.0
    %428 = vmatprep.subr.mxu0 0.0
    %429 = vmatpush1.msra.mxu0 0.0
    %430 = vmatprep.subr.mxu0 0.0
    %431 = vmatpush1.msra.mxu0 0.0
    %432 = vmatprep.subr.mxu0 0.0
    %433 = vmatpush1.msra.mxu0 0.0
    %434 = vmatprep.subr.mxu0 0.0
    %435 = vmatpush1.msra.mxu0 0.0
    %436 = vmatprep.subr.mxu0 0.0
    %437 = vmatpush1.msra.mxu0 0.0
    %438 = vmatprep.subr.mxu0 0.0
    %439 = vmatpush1.msra.mxu0 0.0
    %440 = vmatprep.subr.mxu0 0.0
    %441 = vmatpush1.msra.mxu0 0.0
    %442 = vmatprep.subr.mxu0 0.0
    %443 = vmatpush1.msra.mxu0 0.0
    %444 = vmatprep.subr.mxu0 0.0
    %445 = vmatpush1.msra.mxu0 0.0
    %446 = vmatprep.subr.mxu0 0.0
    %447 = vmatpush1.msra.mxu0 0.0
    %448 = vmatprep.subr.mxu0 0.0
    %449 = vmatpush1.msra.mxu0 0.0
    %450 = vmatprep.subr.mxu0 0.0
    %451 = vmatpush1.msra.mxu0 0.0
    %452 = vmatprep.mubr.f32.mxu0 0.0
    %453 = vmatmul.mubr.f32.gmra.mrb[0].mxu0 %v383
    %v454 = vpop.f32.mrb[0].mxu0
    %v455 = vadd.f32 %v387, %v454
    %v456 = vpop.f32.mrb[0].mxu0
    %457 = vdwg.mxu0
    %v458 = vtanh.pop %v455
    %s459 = scalar_lea.vmem [#allocation10], 16
    %460 = vst [vmem:[%s459] sm:$0xff] %v458
    %s461 = scalar_lea.vmem [#allocation2], 24
    %v462 = vld [vmem:[%s461] sm:$0xff]
    %463 = vmatprep.subr.mxu0 0.0
    %464 = vmatpush1.msra.mxu0 %v221
    %465 = vmatprep.subr.mxu0 0.0
    %466 = vmatpush1.msra.mxu0 %v222
    %467 = vmatprep.subr.mxu0 0.0
    %468 = vmatpush1.msra.mxu0 %v223
    %469 = vmatprep.subr.mxu0 0.0
    %470 = vmatpush1.msra.mxu0 %v224
    %471 = vmatprep.subr.mxu0 0.0
    %472 = vmatpush1.msra.mxu0 %v225
    %473 = vmatprep.subr.mxu0 0.0
    %474 = vmatpush1.msra.mxu0 %v226
    %475 = vmatprep.subr.mxu0 0.0
    %476 = vmatpush1.msra.mxu0 %v227
    %477 = vmatprep.subr.mxu0 0.0
    %478 = vmatpush1.msra.mxu0 %v228
    %479 = vmatprep.subr.mxu0 0.0
    %480 = vmatpush1.msra.mxu0 %v229
    %481 = vmatprep.subr.mxu0 0.0
    %482 = vmatpush1.msra.mxu0 %v230
    %483 = vmatprep.subr.mxu0 0.0
    %484 = vmatpush1.msra.mxu0 %v231
    %485 = vmatprep.subr.mxu0 0.0
    %486 = vmatpush1.msra.mxu0 %v232
    %487 = vmatprep.subr.mxu0 0.0
    %488 = vmatpush1.msra.mxu0 %v233
    %489 = vmatprep.subr.mxu0 0.0
    %490 = vmatpush1.msra.mxu0 %v234
    %491 = vmatprep.subr.mxu0 0.0
    %492 = vmatpush1.msra.mxu0 %v235
    %493 = vmatprep.subr.mxu0 0.0
    %494 = vmatpush1.msra.mxu0 %v236
    %495 = vmatprep.subr.mxu0 0.0
    %496 = vmatpush1.msra.mxu0 0.0
    %497 = vmatprep.subr.mxu0 0.0
    %498 = vmatpush1.msra.mxu0 0.0
    %499 = vmatprep.subr.mxu0 0.0
    %500 = vmatpush1.msra.mxu0 0.0
    %501 = vmatprep.subr.mxu0 0.0
    %502 = vmatpush1.msra.mxu0 0.0
    %503 = vmatprep.subr.mxu0 0.0
    %504 = vmatpush1.msra.mxu0 0.0
    %505 = vmatprep.subr.mxu0 0.0
    %506 = vmatpush1.msra.mxu0 0.0
    %507 = vmatprep.subr.mxu0 0.0
    %508 = vmatpush1.msra.mxu0 0.0
    %509 = vmatprep.subr.mxu0 0.0
    %510 = vmatpush1.msra.mxu0 0.0
    %511 = vmatprep.subr.mxu0 0.0
    %512 = vmatpush1.msra.mxu0 0.0
    %513 = vmatprep.subr.mxu0 0.0
    %514 = vmatpush1.msra.mxu0 0.0
    %515 = vmatprep.subr.mxu0 0.0
    %516 = vmatpush1.msra.mxu0 0.0
    %517 = vmatprep.subr.mxu0 0.0
    %518 = vmatpush1.msra.mxu0 0.0
    %519 = vmatprep.subr.mxu0 0.0
    %520 = vmatpush1.msra.mxu0 0.0
    %521 = vmatprep.subr.mxu0 0.0
    %522 = vmatpush1.msra.mxu0 0.0
    %523 = vmatprep.subr.mxu0 0.0
    %524 = vmatpush1.msra.mxu0 0.0
    %525 = vmatprep.subr.mxu0 0.0
    %526 = vmatpush1.msra.mxu0 0.0
    %527 = vmatprep.mubr.f32.mxu0 0.0
    %528 = vmatmul.mubr.f32.gmra.mrb[0].mxu0 %v458
    %v529 = vpop.f32.mrb[0].mxu0
    %v530 = vadd.f32 %v462, %v529
    %v531 = vpop.f32.mrb[0].mxu0
    %532 = vdwg.mxu0
    %v533 = vtanh.pop %v530
    %s534 = scalar_lea.vmem [#allocation10], 24
    %535 = vst [vmem:[%s534] sm:$0xff] %v533
    %s536 = scalar_lea.vmem [#allocation2], 32
    %v537 = vld [vmem:[%s536] sm:$0xff]
    %538 = vmatprep.subr.mxu0 0.0
    %539 = vmatpush1.msra.mxu0 %v221
    %540 = vmatprep.subr.mxu0 0.0
    %541 = vmatpush1.msra.mxu0 %v222
    %542 = vmatprep.subr.mxu0 0.0
    %543 = vmatpush1.msra.mxu0 %v223
    %544 = vmatprep.subr.mxu0 0.0
    %545 = vmatpush1.msra.mxu0 %v224
    %546 = vmatprep.subr.mxu0 0.0
    %547 = vmatpush1.msra.mxu0 %v225
    %548 = vmatprep.subr.mxu0 0.0
    %549 = vmatpush1.msra.mxu0 %v226
    %550 = vmatprep.subr.mxu0 0.0
    %551 = vmatpush1.msra.mxu0 %v227
    %552 = vmatprep.subr.mxu0 0.0
    %553 = vmatpush1.msra.mxu0 %v228
    %554 = vmatprep.subr.mxu0 0.0
    %555 = vmatpush1.msra.mxu0 %v229
    %556 = vmatprep.subr.mxu0 0.0
    %557 = vmatpush1.msra.mxu0 %v230
    %558 = vmatprep.subr.mxu0 0.0
    %559 = vmatpush1.msra.mxu0 %v231
    %560 = vmatprep.subr.mxu0 0.0
    %561 = vmatpush1.msra.mxu0 %v232
    %562 = vmatprep.subr.mxu0 0.0
    %563 = vmatpush1.msra.mxu0 %v233
    %564 = vmatprep.subr.mxu0 0.0
    %565 = vmatpush1.msra.mxu0 %v234
    %566 = vmatprep.subr.mxu0 0.0
    %567 = vmatpush1.msra.mxu0 %v235
    %568 = vmatprep.subr.mxu0 0.0
    %569 = vmatpush1.msra.mxu0 %v236
    %570 = vmatprep.subr.mxu0 0.0
    %571 = vmatpush1.msra.mxu0 0.0
    %572 = vmatprep.subr.mxu0 0.0
    %573 = vmatpush1.msra.mxu0 0.0
    %574 = vmatprep.subr.mxu0 0.0
    %575 = vmatpush1.msra.mxu0 0.0
    %576 = vmatprep.subr.mxu0 0.0
    %577 = vmatpush1.msra.mxu0 0.0
    %578 = vmatprep.subr.mxu0 0.0
    %579 = vmatpush1.msra.mxu0 0.0
    %580 = vmatprep.subr.mxu0 0.0
    %581 = vmatpush1.msra.mxu0 0.0
    %582 = vmatprep.subr.mxu0 0.0
    %583 = vmatpush1.msra.mxu0 0.0
    %584 = vmatprep.subr.mxu0 0.0
    %585 = vmatpush1.msra.mxu0 0.0
    %586 = vmatprep.subr.mxu0 0.0
    %587 = vmatpush1.msra.mxu0 0.0
    %588 = vmatprep.subr.mxu0 0.0
    %589 = vmatpush1.msra.mxu0 0.0
    %590 = vmatprep.subr.mxu0 0.0
    %591 = vmatpush1.msra.mxu0 0.0
    %592 = vmatprep.subr.mxu0 0.0
    %593 = vmatpush1.msra.mxu0 0.0
    %594 = vmatprep.subr.mxu0 0.0
    %595 = vmatpush1.msra.mxu0 0.0
    %596 = vmatprep.subr.mxu0 0.0
    %597 = vmatpush1.msra.mxu0 0.0
    %598 = vmatprep.subr.mxu0 0.0
    %599 = vmatpush1.msra.mxu0 0.0
    %600 = vmatprep.subr.mxu0 0.0
    %601 = vmatpush1.msra.mxu0 0.0
    %602 = vmatprep.mubr.f32.mxu0 0.0
    %603 = vmatmul.mubr.f32.gmra.mrb[0].mxu0 %v533
    %v604 = vpop.f32.mrb[0].mxu0
    %v605 = vadd.f32 %v537, %v604
    %v606 = vpop.f32.mrb[0].mxu0
    %607 = vdwg.mxu0
    %v608 = vtanh.pop %v605
    %s609 = scalar_lea.vmem [#allocation10], 32
    %610 = vst [vmem:[%s609] sm:$0xff] %v608
    %s611 = scalar_lea.vmem [#allocation2], 40
    %v612 = vld [vmem:[%s611] sm:$0xff]
    %613 = vmatprep.subr.mxu0 0.0
    %614 = vmatpush1.msra.mxu0 %v221
    %615 = vmatprep.subr.mxu0 0.0
    %616 = vmatpush1.msra.mxu0 %v222
    %617 = vmatprep.subr.mxu0 0.0
    %618 = vmatpush1.msra.mxu0 %v223
    %619 = vmatprep.subr.mxu0 0.0
    %620 = vmatpush1.msra.mxu0 %v224
    %621 = vmatprep.subr.mxu0 0.0
    %622 = vmatpush1.msra.mxu0 %v225
    %623 = vmatprep.subr.mxu0 0.0
    %624 = vmatpush1.msra.mxu0 %v226
    %625 = vmatprep.subr.mxu0 0.0
    %626 = vmatpush1.msra.mxu0 %v227
    %627 = vmatprep.subr.mxu0 0.0
    %628 = vmatpush1.msra.mxu0 %v228
    %629 = vmatprep.subr.mxu0 0.0
    %630 = vmatpush1.msra.mxu0 %v229
    %631 = vmatprep.subr.mxu0 0.0
    %632 = vmatpush1.msra.mxu0 %v230
    %633 = vmatprep.subr.mxu0 0.0
    %634 = vmatpush1.msra.mxu0 %v231
    %635 = vmatprep.subr.mxu0 0.0
    %636 = vmatpush1.msra.mxu0 %v232
    %637 = vmatprep.subr.mxu0 0.0
    %638 = vmatpush1.msra.mxu0 %v233
    %639 = vmatprep.subr.mxu0 0.0
    %640 = vmatpush1.msra.mxu0 %v234
    %641 = vmatprep.subr.mxu0 0.0
    %642 = vmatpush1.msra.mxu0 %v235
    %643 = vmatprep.subr.mxu0 0.0
    %644 = vmatpush1.msra.mxu0 %v236
    %645 = vmatprep.subr.mxu0 0.0
    %646 = vmatpush1.msra.mxu0 0.0
    %647 = vmatprep.subr.mxu0 0.0
    %648 = vmatpush1.msra.mxu0 0.0
    %649 = vmatprep.subr.mxu0 0.0
    %650 = vmatpush1.msra.mxu0 0.0
    %651 = vmatprep.subr.mxu0 0.0
    %652 = vmatpush1.msra.mxu0 0.0
    %653 = vmatprep.subr.mxu0 0.0
    %654 = vmatpush1.msra.mxu0 0.0
    %655 = vmatprep.subr.mxu0 0.0
    %656 = vmatpush1.msra.mxu0 0.0
    %657 = vmatprep.subr.mxu0 0.0
    %658 = vmatpush1.msra.mxu0 0.0
    %659 = vmatprep.subr.mxu0 0.0
    %660 = vmatpush1.msra.mxu0 0.0
    %661 = vmatprep.subr.mxu0 0.0
    %662 = vmatpush1.msra.mxu0 0.0
    %663 = vmatprep.subr.mxu0 0.0
    %664 = vmatpush1.msra.mxu0 0.0
    %665 = vmatprep.subr.mxu0 0.0
    %666 = vmatpush1.msra.mxu0 0.0
    %667 = vmatprep.subr.mxu0 0.0
    %668 = vmatpush1.msra.mxu0 0.0
    %669 = vmatprep.subr.mxu0 0.0
    %670 = vmatpush1.msra.mxu0 0.0
    %671 = vmatprep.subr.mxu0 0.0
    %672 = vmatpush1.msra.mxu0 0.0
    %673 = vmatprep.subr.mxu0 0.0
    %674 = vmatpush1.msra.mxu0 0.0
    %675 = vmatprep.subr.mxu0 0.0
    %676 = vmatpush1.msra.mxu0 0.0
    %677 = vmatprep.mubr.f32.mxu0 0.0
    %678 = vmatmul.mubr.f32.gmra.mrb[0].mxu0 %v608
    %v679 = vpop.f32.mrb[0].mxu0
    %v680 = vadd.f32 %v612, %v679
    %v681 = vpop.f32.mrb[0].mxu0
    %682 = vdwg.mxu0
    %v683 = vtanh.pop %v680
    %s684 = scalar_lea.vmem [#allocation10], 40
    %685 = vst [vmem:[%s684] sm:$0xff] %v683
    %s686 = scalar_lea.vmem [#allocation2], 48
    %v687 = vld [vmem:[%s686] sm:$0xff]
    %688 = vmatprep.subr.mxu0 0.0
    %689 = vmatpush1.msra.mxu0 %v221
    %690 = vmatprep.subr.mxu0 0.0
    %691 = vmatpush1.msra.mxu0 %v222
    %692 = vmatprep.subr.mxu0 0.0
    %693 = vmatpush1.msra.mxu0 %v223
    %694 = vmatprep.subr.mxu0 0.0
    %695 = vmatpush1.msra.mxu0 %v224
    %696 = vmatprep.subr.mxu0 0.0
    %697 = vmatpush1.msra.mxu0 %v225
    %698 = vmatprep.subr.mxu0 0.0
    %699 = vmatpush1.msra.mxu0 %v226
    %700 = vmatprep.subr.mxu0 0.0
    %701 = vmatpush1.msra.mxu0 %v227
    %702 = vmatprep.subr.mxu0 0.0
    %703 = vmatpush1.msra.mxu0 %v228
    %704 = vmatprep.subr.mxu0 0.0
    %705 = vmatpush1.msra.mxu0 %v229
    %706 = vmatprep.subr.mxu0 0.0
    %707 = vmatpush1.msra.mxu0 %v230
    %708 = vmatprep.subr.mxu0 0.0
    %709 = vmatpush1.msra.mxu0 %v231
    %710 = vmatprep.subr.mxu0 0.0
    %711 = vmatpush1.msra.mxu0 %v232
    %712 = vmatprep.subr.mxu0 0.0
    %713 = vmatpush1.msra.mxu0 %v233
    %714 = vmatprep.subr.mxu0 0.0
    %715 = vmatpush1.msra.mxu0 %v234
    %716 = vmatprep.subr.mxu0 0.0
    %717 = vmatpush1.msra.mxu0 %v235
    %718 = vmatprep.subr.mxu0 0.0
    %719 = vmatpush1.msra.mxu0 %v236
    %720 = vmatprep.subr.mxu0 0.0
    %721 = vmatpush1.msra.mxu0 0.0
    %722 = vmatprep.subr.mxu0 0.0
    %723 = vmatpush1.msra.mxu0 0.0
    %724 = vmatprep.subr.mxu0 0.0
    %725 = vmatpush1.msra.mxu0 0.0
    %726 = vmatprep.subr.mxu0 0.0
    %727 = vmatpush1.msra.mxu0 0.0
    %728 = vmatprep.subr.mxu0 0.0
    %729 = vmatpush1.msra.mxu0 0.0
    %730 = vmatprep.subr.mxu0 0.0
    %731 = vmatpush1.msra.mxu0 0.0
    %732 = vmatprep.subr.mxu0 0.0
    %733 = vmatpush1.msra.mxu0 0.0
    %734 = vmatprep.subr.mxu0 0.0
    %735 = vmatpush1.msra.mxu0 0.0
    %736 = vmatprep.subr.mxu0 0.0
    %737 = vmatpush1.msra.mxu0 0.0
    %738 = vmatprep.subr.mxu0 0.0
    %739 = vmatpush1.msra.mxu0 0.0
    %740 = vmatprep.subr.mxu0 0.0
    %741 = vmatpush1.msra.mxu0 0.0
    %742 = vmatprep.subr.mxu0 0.0
    %743 = vmatpush1.msra.mxu0 0.0
    %744 = vmatprep.subr.mxu0 0.0
    %745 = vmatpush1.msra.mxu0 0.0
    %746 = vmatprep.subr.mxu0 0.0
    %747 = vmatpush1.msra.mxu0 0.0
    %748 = vmatprep.subr.mxu0 0.0
    %749 = vmatpush1.msra.mxu0 0.0
    %750 = vmatprep.subr.mxu0 0.0
    %751 = vmatpush1.msra.mxu0 0.0
    %752 = vmatprep.mubr.f32.mxu0 0.0
    %753 = vmatmul.mubr.f32.gmra.mrb[0].mxu0 %v683
    %v754 = vpop.f32.mrb[0].mxu0
    %v755 = vadd.f32 %v687, %v754
    %v756 = vpop.f32.mrb[0].mxu0
    %757 = vdwg.mxu0
    %v758 = vtanh.pop %v755
    %s759 = scalar_lea.vmem [#allocation10], 48
    %760 = vst [vmem:[%s759] sm:$0xff] %v758
    %s761 = scalar_lea.vmem [#allocation2], 56
    %v762 = vld [vmem:[%s761] sm:$0xff]
    %763 = vmatprep.subr.mxu0 0.0
    %764 = vmatpush1.msra.mxu0 %v221
    %765 = vmatprep.subr.mxu0 0.0
    %766 = vmatpush1.msra.mxu0 %v222
    %767 = vmatprep.subr.mxu0 0.0
    %768 = vmatpush1.msra.mxu0 %v223
    %769 = vmatprep.subr.mxu0 0.0
    %770 = vmatpush1.msra.mxu0 %v224
    %771 = vmatprep.subr.mxu0 0.0
    %772 = vmatpush1.msra.mxu0 %v225
    %773 = vmatprep.subr.mxu0 0.0
    %774 = vmatpush1.msra.mxu0 %v226
    %775 = vmatprep.subr.mxu0 0.0
    %776 = vmatpush1.msra.mxu0 %v227
    %777 = vmatprep.subr.mxu0 0.0
    %778 = vmatpush1.msra.mxu0 %v228
    %779 = vmatprep.subr.mxu0 0.0
    %780 = vmatpush1.msra.mxu0 %v229
    %781 = vmatprep.subr.mxu0 0.0
    %782 = vmatpush1.msra.mxu0 %v230
    %783 = vmatprep.subr.mxu0 0.0
    %784 = vmatpush1.msra.mxu0 %v231
    %785 = vmatprep.subr.mxu0 0.0
    %786 = vmatpush1.msra.mxu0 %v232
    %787 = vmatprep.subr.mxu0 0.0
    %788 = vmatpush1.msra.mxu0 %v233
    %789 = vmatprep.subr.mxu0 0.0
    %790 = vmatpush1.msra.mxu0 %v234
    %791 = vmatprep.subr.mxu0 0.0
    %792 = vmatpush1.msra.mxu0 %v235
    %793 = vmatprep.subr.mxu0 0.0
    %794 = vmatpush1.msra.mxu0 %v236
    %795 = vmatprep.subr.mxu0 0.0
    %796 = vmatpush1.msra.mxu0 0.0
    %797 = vmatprep.subr.mxu0 0.0
    %798 = vmatpush1.msra.mxu0 0.0
    %799 = vmatprep.subr.mxu0 0.0
    %800 = vmatpush1.msra.mxu0 0.0
    %801 = vmatprep.subr.mxu0 0.0
    %802 = vmatpush1.msra.mxu0 0.0
    %803 = vmatprep.subr.mxu0 0.0
    %804 = vmatpush1.msra.mxu0 0.0
    %805 = vmatprep.subr.mxu0 0.0
    %806 = vmatpush1.msra.mxu0 0.0
    %807 = vmatprep.subr.mxu0 0.0
    %808 = vmatpush1.msra.mxu0 0.0
    %809 = vmatprep.subr.mxu0 0.0
    %810 = vmatpush1.msra.mxu0 0.0
    %811 = vmatprep.subr.mxu0 0.0
    %812 = vmatpush1.msra.mxu0 0.0
    %813 = vmatprep.subr.mxu0 0.0
    %814 = vmatpush1.msra.mxu0 0.0
    %815 = vmatprep.subr.mxu0 0.0
    %816 = vmatpush1.msra.mxu0 0.0
    %817 = vmatprep.subr.mxu0 0.0
    %818 = vmatpush1.msra.mxu0 0.0
    %819 = vmatprep.subr.mxu0 0.0
    %820 = vmatpush1.msra.mxu0 0.0
    %821 = vmatprep.subr.mxu0 0.0
    %822 = vmatpush1.msra.mxu0 0.0
    %823 = vmatprep.subr.mxu0 0.0
    %824 = vmatpush1.msra.mxu0 0.0
    %825 = vmatprep.subr.mxu0 0.0
    %826 = vmatpush1.msra.mxu0 0.0
    %827 = vmatprep.mubr.f32.mxu0 0.0
    %828 = vmatmul.mubr.f32.gmra.mrb[0].mxu0 %v758
    %v829 = vpop.f32.mrb[0].mxu0
    %v830 = vadd.f32 %v762, %v829
    %v831 = vpop.f32.mrb[0].mxu0
    %832 = vdwg.mxu0
    %v833 = vtanh.pop %v830
    %s834 = scalar_lea.vmem [#allocation10], 56
    %835 = vst [vmem:[%s834] sm:$0xff] %v833
    %836 = vst [vmem:[#allocation3] sm:$0xff] %v833
    // Predicated region
    $region34: #{tpu_custom_call.1} parent=1 // pred_check
      _
    $region35: #{tpu_custom_call.1} parent=1 // pred_check_branch
      %838 = sbr.rel (0) target = $region37
    $region36: #{tpu_custom_call.1} parent=1 // pred_region
      %s840 = ssub.s32 1024, 1024
      %841 = vsyncadd [#allocation6], %s840
      %s842 = sshll.u32 [#allocation10], 4
      %s843 = int_to_ptr.vmem [resolvable:$true] %s842
      %848 = dma.vmem_to_hbm [thread:$0]  %s843, 1024, %s4, [#allocation6], 128, 128, 8
    $region37: #{tpu_custom_call.1} parent=1 // pred_fallthru
      _
    // Predicated region
    $region38: #{tpu_custom_call.1} parent=1 // pred_check
      _
    $region39: #{tpu_custom_call.1} parent=1 // pred_check_branch
      %850 = sbr.rel (0) target = $region41
    $region40: #{tpu_custom_call.1} parent=1 // pred_region
      %851 = dma.done [#allocation6], 1024
    $region41: #{tpu_custom_call.1} parent=1 // pred_fallthru
      _
    %852 = vsyncpa [#allocation5], 1
    %853 = vsyncpa [#allocation8], 1
    %854 = vsyncpa [#allocation6], 1

</llo_original>
